<compile_context>
chip_gen: v7x
topology: tpu7x:2x2x1
jax: 0.10.0
libtpu: 0.0.40
codegen_flags: <defaults>
</compile_context>

<pallas_src>
import functools
import numpy as np
import jax
import jax.numpy as jnp
from jax import lax
from jax.experimental import pallas as pl
from jax.experimental.pallas import tpu as pltpu


# ------------------------------ spec helpers -------------------------------

def _rep0(ndim):
    return lambda *_: (0,) * ndim


def _full_spec(arr):
    """BlockSpec covering the whole (shared-weight) array at every grid step."""
    return pl.BlockSpec(arr.shape, _rep0(arr.ndim))


# ------------------------- fused two-layer MLP kernel -----------------------

def _mlp2_kernel(x_ref, w1_ref, b1_ref, w2_ref, b2_ref, o_ref, *,
                 final_tanh, reduce_sum):
    # y = [sum_-1][tanh]( tanh(x @ W1 + b1) @ W2 + b2 ), all intermediates in VMEM.
    h = jnp.tanh(jnp.dot(x_ref[...], w1_ref[...],
                         preferred_element_type=jnp.float32) + b1_ref[...])
    y = jnp.dot(h, w2_ref[...], preferred_element_type=jnp.float32) + b2_ref[...]
    if final_tanh:
        y = jnp.tanh(y)
    if reduce_sum:
        y = jnp.sum(y, axis=-1, keepdims=True)
    o_ref[...] = y.astype(o_ref.dtype)


def fused_mlp2(x2d, w1, b1, w2, b2, *, final_tanh=False, reduce_sum=False,
               max_rows_per_tile=512):
    """Two fused Linear layers applied to a 2-D input (batch folded into rows)."""
    rows, k = x2d.shape
    d_out = 1 if reduce_sum else w2.shape[1]
    tm = rows if rows <= max_rows_per_tile else max_rows_per_tile  # tile is mult of 8
    rows_p = ((rows + tm - 1) // tm) * tm
    xp = x2d if rows_p == rows else jnp.pad(x2d, ((0, rows_p - rows), (0, 0)))
    out = pl.pallas_call(
        functools.partial(_mlp2_kernel, final_tanh=final_tanh,
                          reduce_sum=reduce_sum),
        out_shape=jax.ShapeDtypeStruct((rows_p, d_out), jnp.float32),
        grid=(rows_p // tm,),
        in_specs=[
            pl.BlockSpec((tm, k), lambda i: (i, 0)),
            _full_spec(w1),
            pl.BlockSpec((1, w1.shape[1]), lambda i: (0, 0)),
            _full_spec(w2),
            pl.BlockSpec((1, w2.shape[1]), lambda i: (0, 0)),
        ],
        out_specs=pl.BlockSpec((tm, d_out), lambda i: (i, 0)),
        compiler_params=pltpu.CompilerParams(dimension_semantics=("parallel",)),
    )(xp.astype(jnp.float32), w1, b1.reshape(1, -1), w2, b2.reshape(1, -1))
    return out if rows_p == rows else out[:rows]


# --------------------------- fused encoder core -----------------------------

def _encoder_core_kernel(*refs, num_layers, has_edge):
    it = iter(refs)
    adj_ref = next(it)
    edge_sum_ref = next(it) if has_edge else None
    nh_ref = next(it)
    noise_ref = next(it)
    gcs_ref = next(it)
    if has_edge:
        ch_ref = next(it)   # combine weight block acting on hidden   (L,H,H)
        cm_ref = next(it)   # combine weight block acting on mix      (L,H,H)
        cb_ref = next(it)   # combine bias                            (L,1,H)
    wm1_ref = next(it); bm1_ref = next(it); wm2_ref = next(it); bm2_ref = next(it)
    ws1_ref = next(it); bs1_ref = next(it); ws2_ref = next(it); bs2_ref = next(it)
    latent_ref = next(it); mean_ref = next(it); logstd_ref = next(it)

    adj = adj_ref[0]                       # (N, N)
    hidden = nh_ref[0]                     # (N, H)
    if has_edge:
        edge_sum = edge_sum_ref[0]         # (N, N) == edge_hidden.sum(-1)

    # mean/logstd fc1 over concat(all_hidden) == sum_l all_hidden[l] @ W1[l]
    acc_m = jnp.dot(hidden, wm1_ref[0], preferred_element_type=jnp.float32)
    acc_s = jnp.dot(hidden, ws1_ref[0], preferred_element_type=jnp.float32)

    for l in range(num_layers):
        x = jnp.dot(hidden, gcs_ref[l], preferred_element_type=jnp.float32)
        hidden = jnp.tanh(jnp.dot(adj, x, preferred_element_type=jnp.float32))
        if has_edge:
            # einsum('bijc,bjk->bik', edge_hidden, hidden) == edge_sum @ hidden
            mix = jnp.tanh(jnp.dot(edge_sum, hidden,
                                   preferred_element_type=jnp.float32))
            # combine(cat(hidden, mix)) == hidden @ Wc[:H] + mix @ Wc[H:] + bc
            hidden = jnp.tanh(
                jnp.dot(hidden, ch_ref[l], preferred_element_type=jnp.float32)
                + jnp.dot(mix, cm_ref[l], preferred_element_type=jnp.float32)
                + cb_ref[l])
        acc_m = acc_m + jnp.dot(hidden, wm1_ref[l + 1],
                                preferred_element_type=jnp.float32)
        acc_s = acc_s + jnp.dot(hidden, ws1_ref[l + 1],
                                preferred_element_type=jnp.float32)

    mean = jnp.dot(jnp.tanh(acc_m + bm1_ref[...]), wm2_ref[...],
                   preferred_element_type=jnp.float32) + bm2_ref[...]
    logstd = jnp.dot(jnp.tanh(acc_s + bs1_ref[...]), ws2_ref[...],
                     preferred_element_type=jnp.float32) + bs2_ref[...]
    latent = noise_ref[0] * jnp.exp(logstd) + mean

    latent_ref[0] = latent.astype(latent_ref.dtype)
    mean_ref[0] = mean.astype(mean_ref.dtype)
    logstd_ref[0] = logstd.astype(logstd_ref.dtype)


def encoder_core(p, adj, node_hidden, noise, edge_sum=None):
    B, N, H = node_hidden.shape
    z = p["z_dim"]
    L = p["num_layers"]
    has_edge = edge_sum is not None

    inputs = [adj]
    in_specs = [pl.BlockSpec((1, N, N), lambda i: (i, 0, 0))]
    if has_edge:
        inputs.append(edge_sum)
        in_specs.append(pl.BlockSpec((1, N, N), lambda i: (i, 0, 0)))
    inputs += [node_hidden, noise, p["gcs"]]
    in_specs += [
        pl.BlockSpec((1, N, H), lambda i: (i, 0, 0)),
        pl.BlockSpec((1, N, z), lambda i: (i, 0, 0)),
        _full_spec(p["gcs"]),
    ]
    if has_edge:
        for name in ("comb_h", "comb_m", "comb_b"):
            inputs.append(p[name])
            in_specs.append(_full_spec(p[name]))
    for name in ("wm1", "bm1", "wm2", "bm2", "ws1", "bs1", "ws2", "bs2"):
        inputs.append(p[name])
        in_specs.append(_full_spec(p[name]))

    out_spec = pl.BlockSpec((1, N, z), lambda i: (i, 0, 0))
    latent, mean, logstd = pl.pallas_call(
        functools.partial(_encoder_core_kernel, num_layers=L, has_edge=has_edge),
        out_shape=tuple(jax.ShapeDtypeStruct((B, N, z), jnp.float32)
                        for _ in range(3)),
        grid=(B,),
        in_specs=in_specs,
        out_specs=(out_spec, out_spec, out_spec),
        compiler_params=pltpu.CompilerParams(dimension_semantics=("parallel",)),
    )(*inputs)
    return latent, mean, logstd


# -------------------- fused GraphCluster conv-chain kernel -------------------

def _cluster_conv_kernel(adj_ref, h_ref, gcs_ref, wa_ref, o_ref, *, num_layers):
    adj = adj_ref[0]
    h = h_ref[0]
    for l in range(num_layers):
        h = jnp.tanh(jnp.dot(adj,
                             jnp.dot(h, gcs_ref[l], preferred_element_type=jnp.float32),
                             preferred_element_type=jnp.float32))
    score = jnp.tanh(jnp.dot(adj,
                             jnp.dot(h, wa_ref[...], preferred_element_type=jnp.float32),
                             preferred_element_type=jnp.float32))
    o_ref[0] = score.astype(o_ref.dtype)


# ----------------------- fused decoder / pooling kernels ---------------------

def _decoder_kernel(z_ref, w_ref, o_ref, *, apply_sigmoid):
    zl = z_ref[0]                                                   # (N, z)
    zw = jnp.dot(zl, w_ref[...], preferred_element_type=jnp.float32)
    out = lax.dot_general(zw, zl, (((1,), (1,)), ((), ())),
                          preferred_element_type=jnp.float32)       # zw @ zl^T
    if apply_sigmoid:
        out = jax.nn.sigmoid(out)
    o_ref[0] = out.astype(o_ref.dtype)


def _pool_kernel(at_ref, lat_ref, adj_ref, sl_ref, sa_ref):
    at = at_ref[0]                  # (Ncl, N)  == assign^T
    lat = lat_ref[0]                # (N, z)
    adj = adj_ref[0]                # (N, N)
    sl = jnp.dot(at, lat, preferred_element_type=jnp.float32)       # (Ncl, z)
    sa = jnp.dot(at, adj, preferred_element_type=jnp.float32)       # (Ncl, N)
    sadj = lax.dot_general(sa, at, (((1,), (1,)), ((), ())),
                           preferred_element_type=jnp.float32)      # (Ncl, Ncl)
    # F.normalize(dim=1): L2 norm over the cluster axis (axis 0 of this tile)
    nrm = jnp.sqrt(jnp.sum(sl * sl, axis=0, keepdims=True))
    sl_ref[0] = (sl / jnp.maximum(nrm, 1e-12)).astype(sl_ref.dtype)
    sa_ref[0] = sadj.astype(sa_ref.dtype)


# ------------------------------ parameter init -------------------------------

class KeyGen:
    def __init__(self, key):
        self.key = key

    def __call__(self):
        self.key, sub = jax.random.split(self.key)
        return sub


def glorot(kg, din, dout):
    r = float(np.sqrt(6.0 / (din + dout)))
    return jax.random.uniform(kg(), (din, dout), minval=-r, maxval=r, dtype=jnp.float32)


def linear_init(kg, din, dout):
    bound = float(1.0 / np.sqrt(din))
    w = jax.random.uniform(kg(), (din, dout), minval=-bound, maxval=bound, dtype=jnp.float32)
    b = jax.random.uniform(kg(), (dout,), minval=-bound, maxval=bound, dtype=jnp.float32)
    return {"w": w, "b": b}


def init_graph_encoder(kg, num_layers, node_dim, edge_dim, hidden_dim, z_dim):
    node_fc1 = linear_init(kg, node_dim, 128)
    node_fc2 = linear_init(kg, 128, hidden_dim)
    gcs = jnp.stack([glorot(kg, hidden_dim, hidden_dim) for _ in range(num_layers)])
    mean_fc1 = linear_init(kg, (num_layers + 1) * hidden_dim, 128)
    mean_fc2 = linear_init(kg, 128, z_dim)
    logstd_fc1 = linear_init(kg, (num_layers + 1) * hidden_dim, 128)
    logstd_fc2 = linear_init(kg, 128, z_dim)
    p = {
        "node_fc1": node_fc1, "node_fc2": node_fc2,
        "gcs": gcs,
        # fc1(concat(all_hidden)) split by concat block: (L+1, H, 128)
        "wm1": mean_fc1["w"].reshape(num_layers + 1, hidden_dim, 128),
        "bm1": mean_fc1["b"].reshape(1, 128),
        "wm2": mean_fc2["w"], "bm2": mean_fc2["b"].reshape(1, -1),
        "ws1": logstd_fc1["w"].reshape(num_layers + 1, hidden_dim, 128),
        "bs1": logstd_fc1["b"].reshape(1, 128),
        "ws2": logstd_fc2["w"], "bs2": logstd_fc2["b"].reshape(1, -1),
        "num_layers": num_layers,
        "z_dim": z_dim,
    }
    if edge_dim is not None:
        p["edge_fc1"] = linear_init(kg, edge_dim, 128)
        p["edge_fc2"] = linear_init(kg, 128, hidden_dim)
        combine = [linear_init(kg, 2 * hidden_dim, hidden_dim) for _ in range(num_layers)]
        p["comb_h"] = jnp.stack([c["w"][:hidden_dim] for c in combine])     # (L,H,H)
        p["comb_m"] = jnp.stack([c["w"][hidden_dim:] for c in combine])     # (L,H,H)
        p["comb_b"] = jnp.stack([c["b"].reshape(1, -1) for c in combine])   # (L,1,H)
    return p


def init_graph_cluster(kg, num_layers, input_dim, hidden_dim, z_dim):
    return {
        "fc1": linear_init(kg, input_dim, 128),
        "fc2": linear_init(kg, 128, hidden_dim),
        "gcs": jnp.stack([glorot(kg, hidden_dim, hidden_dim) for _ in range(num_layers)]),
        "assign": glorot(kg, hidden_dim, z_dim),
        "num_layers": num_layers,
    }


def init_sn_decoder(kg, z_dim):
    # TODO(synk): SnDecoder's source is not in the reference module; approximated
    # by a learned bilinear second-order decoder z @ W @ z^T.
    return {"w": glorot(kg, z_dim, z_dim)}


def init_mgvae(kg, clusters, num_layers, node_dim, edge_dim, hidden_dim, z_dim):
    p = {
        "base_encoder": init_graph_encoder(kg, num_layers, node_dim, edge_dim, hidden_dim, z_dim),
        "base_decoder": init_sn_decoder(kg, z_dim),
        "cluster_learner": [],
        "global_encoder": [],
        "global_decoder": [],
        "node_fc1": linear_init(kg, z_dim, 128),
        "node_fc2": linear_init(kg, 128, node_dim),
    }
    for l in range(len(clusters)):
        Ncl = clusters[l]
        p["cluster_learner"].append(init_graph_cluster(kg, 2, z_dim, hidden_dim, Ncl))
        p["global_encoder"].append(init_graph_encoder(kg, 2, z_dim, None, hidden_dim, z_dim))
        p["global_decoder"].append(init_sn_decoder(kg, z_dim))
    return p


# ------------------------------ forward modules ------------------------------

def graph_encoder_fwd(p, adj, node_feat, edge_feat, noise_key):
    B, N = node_feat.shape[0], node_feat.shape[1]
    z = p["z_dim"]
    # node MLP: batch folded into rows, single fused kernel
    nh = fused_mlp2(node_feat.reshape(B * N, -1),
                    p["node_fc1"]["w"], p["node_fc1"]["b"],
                    p["node_fc2"]["w"], p["node_fc2"]["b"],
                    final_tanh=True).reshape(B, N, -1)
    edge_sum = None
    if edge_feat is not None and "edge_fc1" in p:
        E = edge_feat.shape[-1]
        # edge MLP + feature-axis sum fused: edge_hidden never touches HBM
        es = fused_mlp2(edge_feat.reshape(B * N * N, E),
                        p["edge_fc1"]["w"], p["edge_fc1"]["b"],
                        p["edge_fc2"]["w"], p["edge_fc2"]["b"],
                        final_tanh=True, reduce_sum=True)
        edge_sum = es.reshape(B, N, N)
    noise = jax.random.normal(noise_key, (B, N, z), dtype=jnp.float32)
    return encoder_core(p, adj, nh, noise, edge_sum)


def graph_cluster_fwd(p, adj, X):
    B, N = X.shape[0], X.shape[1]
    H = p["fc2"]["w"].shape[1]
    h = fused_mlp2(X.reshape(B * N, -1),
                   p["fc1"]["w"], p["fc1"]["b"],
                   p["fc2"]["w"], p["fc2"]["b"],
                   final_tanh=True).reshape(B, N, H)
    Ncl = p["assign"].shape[1]
    return pl.pallas_call(
        functools.partial(_cluster_conv_kernel, num_layers=p["num_layers"]),
        out_shape=jax.ShapeDtypeStruct((B, N, Ncl), jnp.float32),
        grid=(B,),
        in_specs=[
            pl.BlockSpec((1, N, N), lambda i: (i, 0, 0)),
            pl.BlockSpec((1, N, H), lambda i: (i, 0, 0)),
            _full_spec(p["gcs"]),
            _full_spec(p["assign"]),
        ],
        out_specs=pl.BlockSpec((1, N, Ncl), lambda i: (i, 0, 0)),
        compiler_params=pltpu.CompilerParams(dimension_semantics=("parallel",)),
    )(adj, h, p["gcs"], p["assign"])


def sn_decoder_fwd(p, latent, apply_sigmoid=False):
    B, N, z = latent.shape
    return pl.pallas_call(
        functools.partial(_decoder_kernel, apply_sigmoid=apply_sigmoid),
        out_shape=jax.ShapeDtypeStruct((B, N, N), jnp.float32),
        grid=(B,),
        in_specs=[
            pl.BlockSpec((1, N, z), lambda i: (i, 0, 0)),
            _full_spec(p["w"]),
        ],
        out_specs=pl.BlockSpec((1, N, N), lambda i: (i, 0, 0)),
        compiler_params=pltpu.CompilerParams(dimension_semantics=("parallel",)),
    )(latent, p["w"])


def cluster_pool(assign, prev_latent, prev_adj):
    B, N, Ncl = assign.shape
    z = prev_latent.shape[-1]
    at = jnp.transpose(assign, (0, 2, 1))    # tiny (B, Ncl, N) transpose
    sl, sadj = pl.pallas_call(
        _pool_kernel,
        out_shape=(jax.ShapeDtypeStruct((B, Ncl, z), jnp.float32),
                   jax.ShapeDtypeStruct((B, Ncl, Ncl), jnp.float32)),
        grid=(B,),
        in_specs=[
            pl.BlockSpec((1, Ncl, N), lambda i: (i, 0, 0)),
            pl.BlockSpec((1, N, z), lambda i: (i, 0, 0)),
            pl.BlockSpec((1, N, N), lambda i: (i, 0, 0)),
        ],
        out_specs=(pl.BlockSpec((1, Ncl, z), lambda i: (i, 0, 0)),
                   pl.BlockSpec((1, Ncl, Ncl), lambda i: (i, 0, 0))),
        compiler_params=pltpu.CompilerParams(dimension_semantics=("parallel",)),
    )(at, prev_latent, prev_adj)
    return sl, sadj


def gumbel_softmax_hard(key, logits, tau=1.0):
    u = jax.random.uniform(key, logits.shape, minval=1e-10, maxval=1.0)
    g = -jnp.log(-jnp.log(u))
    y = jax.nn.softmax((logits + g) / tau, axis=2)
    return jax.nn.one_hot(jnp.argmax(y, axis=2), logits.shape[2], dtype=jnp.float32)


def mgvae_2nd_forward(params, clusters, adj, node_feat, edge_feat, key):
    keys = jax.random.split(key, 1 + 2 * max(len(clusters), 1))
    outputs = []
    base_latent, base_mean, base_logstd = graph_encoder_fwd(
        params["base_encoder"], adj, node_feat, edge_feat, keys[0])
    B, N = adj.shape[0], adj.shape[1]
    base_predict = sn_decoder_fwd(params["base_decoder"], base_latent, apply_sigmoid=True)
    node_predict = fused_mlp2(
        base_latent.reshape(B * N, -1),
        params["node_fc1"]["w"], params["node_fc1"]["b"],
        params["node_fc2"]["w"], params["node_fc2"]["b"],
        final_tanh=False).reshape(B, N, -1)
    outputs.append([base_latent, base_mean, base_logstd, base_predict, adj])
    ki = 1
    l = len(clusters) - 1
    while l >= 0:
        prev_adj = outputs[-1][4]
        prev_latent = outputs[-1][0]
        assign_score = graph_cluster_fwd(params["cluster_learner"][l], prev_adj, prev_latent)
        assign = gumbel_softmax_hard(keys[ki], assign_score); ki += 1
        shrinked_latent, shrinked_adj = cluster_pool(assign, prev_latent, prev_adj)
        # Matches the reference exactly: torch.sum with no dim → whole-tensor sum.
        shrinked_adj = shrinked_adj / jnp.sum(shrinked_adj)
        next_latent, next_mean, next_logstd = graph_encoder_fwd(
            params["global_encoder"][l], shrinked_adj, shrinked_latent, None, keys[ki]); ki += 1
        next_predict = sn_decoder_fwd(params["global_decoder"][l], next_latent)
        outputs.append([next_latent, next_mean, next_logstd, next_predict, shrinked_adj])
        l -= 1
    return outputs, node_predict


# ----------------------------------- main ------------------------------------

if __name__ == "__main__":
    B, N = 2, 8
    node_dim, edge_dim = 4, 4
    hidden_dim, z_dim = 32, 32
    num_layers = 3
    clusters = [2, 4]            # coarsening levels (processed last -> first)

    kg = KeyGen(jax.random.PRNGKey(1))
    params = init_mgvae(kg, clusters, num_layers, node_dim, edge_dim, hidden_dim, z_dim)

    k_adj, k_node, k_edge, k_fwd = jax.random.split(jax.random.PRNGKey(0), 4)
    a = (jax.random.uniform(k_adj, (B, N, N)) < 0.5).astype(jnp.float32)
    adj = jnp.maximum(a, jnp.transpose(a, (0, 2, 1)))         # symmetric 0/1 adjacency
    node_feat = jax.random.normal(k_node, (B, N, node_dim), dtype=jnp.float32)
    edge_feat = jax.random.normal(k_edge, (B, N, N, edge_dim), dtype=jnp.float32)

    outputs, node_predict = mgvae_2nd_forward(params, clusters, adj, node_feat, edge_feat, k_fwd)
    jax.block_until_ready(node_predict)
    for level in outputs:
        for t in level:
            jax.block_until_ready(t)
    print("KERNEL_OK")
</pallas_src>

<mosaic_0001>
module attributes {stable_mosaic.version = 11 : i64} {
  func.func @_mlp2_kernel(%arg0: i32, %arg1: memref<16x4xf32, #tpu.memory_space<vmem>>, %arg2: memref<4x128xf32, #tpu.memory_space<vmem>>, %arg3: memref<1x128xf32, #tpu.memory_space<vmem>>, %arg4: memref<128x32xf32, #tpu.memory_space<vmem>>, %arg5: memref<1x32xf32, #tpu.memory_space<vmem>>, %arg6: memref<16x32xf32, #tpu.memory_space<vmem>>) attributes {dimension_semantics = [#tpu.dimension_semantics<parallel>], iteration_bounds = array<i64: 1>, scalar_prefetch = 0 : i64, scratch_operands = 0 : i64, tpu.core_type = #tpu.core_type<tc>, window_params = [{transform_indices = @transform_0, window_bounds = array<i64: 16, 4>}, {pipeline_mode = #tpu.pipeline_mode<synchronous>, transform_indices = @transform_1, window_bounds = array<i64: 4, 128>}, {pipeline_mode = #tpu.pipeline_mode<synchronous>, transform_indices = @transform_2, window_bounds = array<i64: 1, 128>}, {pipeline_mode = #tpu.pipeline_mode<synchronous>, transform_indices = @transform_3, window_bounds = array<i64: 128, 32>}, {pipeline_mode = #tpu.pipeline_mode<synchronous>, transform_indices = @transform_4, window_bounds = array<i64: 1, 32>}, {transform_indices = @transform_5, window_bounds = array<i64: 16, 32>}]} {
    %c0 = arith.constant 0 : index
    %c0_0 = arith.constant 0 : index
    %0 = vector.load %arg1[%c0, %c0_0] : memref<16x4xf32, #tpu.memory_space<vmem>>, vector<16x4xf32>
    %c0_1 = arith.constant 0 : index
    %c0_2 = arith.constant 0 : index
    %1 = vector.load %arg2[%c0_1, %c0_2] : memref<4x128xf32, #tpu.memory_space<vmem>>, vector<4x128xf32>
    %cst = arith.constant dense<0.000000e+00> : vector<16x128xf32>
    %2 = tpu.matmul %0, %1, %cst {dimension_numbers = #tpu.dot_dimension_numbers<[1], [0], [0], [1], [0, 0, 1, 1], [], []>} : vector<16x4xf32>, vector<4x128xf32>, vector<16x128xf32> -> vector<16x128xf32>
    %c0_3 = arith.constant 0 : index
    %c0_4 = arith.constant 0 : index
    %3 = vector.load %arg3[%c0_3, %c0_4] : memref<1x128xf32, #tpu.memory_space<vmem>>, vector<1x128xf32>
    %4 = vector.broadcast %3 : vector<1x128xf32> to vector<16x128xf32>
    %5 = arith.addf %2, %4 : vector<16x128xf32>
    %6 = math.tanh %5 : vector<16x128xf32>
    %c0_5 = arith.constant 0 : index
    %c0_6 = arith.constant 0 : index
    %7 = vector.load %arg4[%c0_5, %c0_6] : memref<128x32xf32, #tpu.memory_space<vmem>>, vector<128x32xf32>
    %cst_7 = arith.constant dense<0.000000e+00> : vector<16x32xf32>
    %8 = tpu.matmul %6, %7, %cst_7 {dimension_numbers = #tpu.dot_dimension_numbers<[1], [0], [0], [1], [0, 0, 1, 1], [], []>} : vector<16x128xf32>, vector<128x32xf32>, vector<16x32xf32> -> vector<16x32xf32>
    %c0_8 = arith.constant 0 : index
    %c0_9 = arith.constant 0 : index
    %9 = vector.load %arg5[%c0_8, %c0_9] : memref<1x32xf32, #tpu.memory_space<vmem>>, vector<1x32xf32>
    %10 = vector.broadcast %9 : vector<1x32xf32> to vector<16x32xf32>
    %11 = arith.addf %8, %10 : vector<16x32xf32>
    %12 = math.tanh %11 : vector<16x32xf32>
    %c0_10 = arith.constant 0 : index
    %c0_11 = arith.constant 0 : index
    %13 = vector.load %arg6[%c0_10, %c0_11] : memref<16x32xf32, #tpu.memory_space<vmem>>, vector<16x32xf32>
    tpu.vector_store %arg6[%c0_10, %c0_11], %12 {strides = array<i32>} : memref<16x32xf32, #tpu.memory_space<vmem>>, vector<16x32xf32>,
    return
  }
  func.func @transform_0(%arg0: i32) -> (i32, i32) {
    %c0_i32 = arith.constant 0 : i32
    %c0_i32_0 = arith.constant 0 : i32
    return %arg0, %c0_i32 : i32, i32
  }
  func.func @transform_1(%arg0: i32) -> (i32, i32) {
    %c0_i32 = arith.constant 0 : i32
    %c0_i32_0 = arith.constant 0 : i32
    %c0_i32_1 = arith.constant 0 : i32
    return %c0_i32, %c0_i32_0 : i32, i32
  }
  func.func @transform_2(%arg0: i32) -> (i32, i32) {
    %c0_i32 = arith.constant 0 : i32
    %c0_i32_0 = arith.constant 0 : i32
    %c0_i32_1 = arith.constant 0 : i32
    return %c0_i32, %c0_i32_0 : i32, i32
  }
  func.func @transform_3(%arg0: i32) -> (i32, i32) {
    %c0_i32 = arith.constant 0 : i32
    %c0_i32_0 = arith.constant 0 : i32
    %c0_i32_1 = arith.constant 0 : i32
    return %c0_i32, %c0_i32_0 : i32, i32
  }
  func.func @transform_4(%arg0: i32) -> (i32, i32) {
    %c0_i32 = arith.constant 0 : i32
    %c0_i32_0 = arith.constant 0 : i32
    %c0_i32_1 = arith.constant 0 : i32
    return %c0_i32, %c0_i32_0 : i32, i32
  }
  func.func @transform_5(%arg0: i32) -> (i32, i32) {
    %c0_i32 = arith.constant 0 : i32
    %c0_i32_0 = arith.constant 0 : i32
    return %arg0, %c0_i32 : i32, i32
  }
}

</mosaic_0001>

<llo_original>
// kernel: tpu_custom_call.1
$region0: #{tpu_custom_call.1}
  #allocation0 [shape = 'u32[]', space=smem, size = 0x4, offset = 0x4, fixed_abs, tag = 'smem constant byte address 0x4 - core index']
  #allocation1 [shape = 'u32[144,128]{1,0:T(1,128)}', space=vmem, size = 0x12000, scoped, tag = 'internal scratch']
  %s0 = inlined_call_operand.vmem [shape: f32[16,4], index: 0, kind: input, shape index: {}]
  %s1 = inlined_call_operand.vmem [shape: f32[4,128], index: 1, kind: input, shape index: {}]
  %s2 = inlined_call_operand.vmem [shape: f32[1,128], index: 2, kind: input, shape index: {}]
  %s3 = inlined_call_operand.vmem [shape: f32[128,32], index: 3, kind: input, shape index: {}]
  %s4 = inlined_call_operand.vmem [shape: f32[1,32], index: 4, kind: input, shape index: {}]
  %s5 = inlined_call_operand.hbm [shape: f32[16,32], index: 5, kind: output, shape index: {}]
  %s6 = sld [smem:[#allocation0]]
  $region30: #{tpu_custom_call.1} parent=0
    _
  %s8 = ssub.s32 1, %s6
  %s9 = scalar_select 0, %s8, %s6
  $region1: #{tpu_custom_call.1} parent=0
    #allocation2 [shape = 'u8[8192]{0}', space=vmem, size = 0x2000, scoped, tag = 'output window, operand 0, single buffered']
    #allocation3 [shape = 's32[1]{0}', space=sflag, size = 0x4, scoped, tag = 'scoped memory for tpu_custom_call.1']
    %10 = vsyncpa [#allocation3], 0
    // Predicated region
    $region2: #{tpu_custom_call.1} parent=1 // pred_check
      _
    $region3: #{tpu_custom_call.1} parent=1 // pred_check_branch
      %12 = sbr.rel (0) target = $region5
    $region4: #{tpu_custom_call.1} parent=1 // pred_region
      _
    $region5: #{tpu_custom_call.1} parent=1 // pred_fallthru
      _
    // Predicated region
    $region6: #{tpu_custom_call.1} parent=1 // pred_check
      _
    $region7: #{tpu_custom_call.1} parent=1 // pred_check_branch
      %14 = sbr.rel (0) target = $region9
    $region8: #{tpu_custom_call.1} parent=1 // pred_region
      _
    $region9: #{tpu_custom_call.1} parent=1 // pred_fallthru
      _
    // Predicated region
    $region10: #{tpu_custom_call.1} parent=1 // pred_check
      _
    $region11: #{tpu_custom_call.1} parent=1 // pred_check_branch
      %16 = sbr.rel (0) target = $region13
    $region12: #{tpu_custom_call.1} parent=1 // pred_region
      _
    $region13: #{tpu_custom_call.1} parent=1 // pred_fallthru
      _
    // Predicated region
    $region14: #{tpu_custom_call.1} parent=1 // pred_check
      _
    $region15: #{tpu_custom_call.1} parent=1 // pred_check_branch
      %18 = sbr.rel (0) target = $region17
    $region16: #{tpu_custom_call.1} parent=1 // pred_region
      _
    $region17: #{tpu_custom_call.1} parent=1 // pred_fallthru
      _
    // Predicated region
    $region18: #{tpu_custom_call.1} parent=1 // pred_check
      _
    $region19: #{tpu_custom_call.1} parent=1 // pred_check_branch
      %20 = sbr.rel (0) target = $region21
    $region20: #{tpu_custom_call.1} parent=1 // pred_region
      _
    $region21: #{tpu_custom_call.1} parent=1 // pred_fallthru
      _
    %v21 = vld [vmem:[%s0] sm:$0xff]
    %v22 = vld [vmem:[%s0 + $0x8] sm:$0xff]
    %v23 = vld [vmem:[%s1] sm:$0xf]
    %v24 = vld [vmem:[%s2] sm:$0x1]
    %v26 = vlaneseq
    %v27 = vshrl.u32 %v26, 7
    %v28 = vsub.s32 0, %v27
    %v29 = vrot.slane %v24, %v28
    %vm31 = vcmask 31744
    %v33 = vsel %vm31, %v21, 0
    %v36 = vsel %vm31, %v22, 0
    %vm38 = vcmask 1043456
    %v40 = vsel %vm38, %v23, 0
    %42 = vmatprep.subr.mxu0 0.0
    %43 = vmatpush1.msra.mxu0 %v40
    %44 = vmatprep.subr.mxu0 0.0
    %45 = vmatpush1.msra.mxu0 0.0
    %46 = vmatprep.subr.mxu0 0.0
    %47 = vmatpush1.msra.mxu0 0.0
    %48 = vmatprep.subr.mxu0 0.0
    %49 = vmatpush1.msra.mxu0 0.0
    %50 = vmatprep.subr.mxu0 0.0
    %51 = vmatpush1.msra.mxu0 0.0
    %52 = vmatprep.subr.mxu0 0.0
    %53 = vmatpush1.msra.mxu0 0.0
    %54 = vmatprep.subr.mxu0 0.0
    %55 = vmatpush1.msra.mxu0 0.0
    %56 = vmatprep.subr.mxu0 0.0
    %57 = vmatpush1.msra.mxu0 0.0
    %58 = vmatprep.subr.mxu0 0.0
    %59 = vmatpush1.msra.mxu0 0.0
    %60 = vmatprep.subr.mxu0 0.0
    %61 = vmatpush1.msra.mxu0 0.0
    %62 = vmatprep.subr.mxu0 0.0
    %63 = vmatpush1.msra.mxu0 0.0
    %64 = vmatprep.subr.mxu0 0.0
    %65 = vmatpush1.msra.mxu0 0.0
    %66 = vmatprep.subr.mxu0 0.0
    %67 = vmatpush1.msra.mxu0 0.0
    %68 = vmatprep.subr.mxu0 0.0
    %69 = vmatpush1.msra.mxu0 0.0
    %70 = vmatprep.subr.mxu0 0.0
    %71 = vmatpush1.msra.mxu0 0.0
    %72 = vmatprep.subr.mxu0 0.0
    %73 = vmatpush1.msra.mxu0 0.0
    %74 = vmatprep.subr.mxu0 0.0
    %75 = vmatpush1.msra.mxu0 0.0
    %76 = vmatprep.subr.mxu0 0.0
    %77 = vmatpush1.msra.mxu0 0.0
    %78 = vmatprep.subr.mxu0 0.0
    %79 = vmatpush1.msra.mxu0 0.0
    %80 = vmatprep.subr.mxu0 0.0
    %81 = vmatpush1.msra.mxu0 0.0
    %82 = vmatprep.subr.mxu0 0.0
    %83 = vmatpush1.msra.mxu0 0.0
    %84 = vmatprep.subr.mxu0 0.0
    %85 = vmatpush1.msra.mxu0 0.0
    %86 = vmatprep.subr.mxu0 0.0
    %87 = vmatpush1.msra.mxu0 0.0
    %88 = vmatprep.subr.mxu0 0.0
    %89 = vmatpush1.msra.mxu0 0.0
    %90 = vmatprep.subr.mxu0 0.0
    %91 = vmatpush1.msra.mxu0 0.0
    %92 = vmatprep.subr.mxu0 0.0
    %93 = vmatpush1.msra.mxu0 0.0
    %94 = vmatprep.subr.mxu0 0.0
    %95 = vmatpush1.msra.mxu0 0.0
    %96 = vmatprep.subr.mxu0 0.0
    %97 = vmatpush1.msra.mxu0 0.0
    %98 = vmatprep.subr.mxu0 0.0
    %99 = vmatpush1.msra.mxu0 0.0
    %100 = vmatprep.subr.mxu0 0.0
    %101 = vmatpush1.msra.mxu0 0.0
    %102 = vmatprep.subr.mxu0 0.0
    %103 = vmatpush1.msra.mxu0 0.0
    %104 = vmatprep.subr.mxu0 0.0
    %105 = vmatpush1.msra.mxu0 0.0
    %106 = vmatprep.mubr.f32.mxu0 0.0
    %107 = vmatmul.mubr.f32.gmra.mrb[0].mxu0 %v33
    %v108 = vpop.f32.mrb[0].mxu0
    %v109 = vadd.f32 %v29, %v108
    %v110 = vpop.f32.mrb[0].mxu0
    %111 = vmatprep.mubr.f32.mxu0 0.0
    %112 = vmatmul.mubr.f32.gmra.mrb[0].mxu0 %v36
    %v113 = vpop.f32.mrb[0].mxu0
    %v114 = vadd.f32 %v29, %v113
    %v115 = vpop.f32.mrb[0].mxu0
    %116 = vdwg.mxu0
    %v117 = vtanh.pop %v109
    %v118 = vtanh.pop %v114
    %v119 = vld [vmem:[%s3] sm:$0xff]
    %v120 = vld [vmem:[%s3 + $0x8] sm:$0xff]
    %v121 = vld [vmem:[%s3 + $0x10] sm:$0xff]
    %v122 = vld [vmem:[%s3 + $0x18] sm:$0xff]
    %v123 = vld [vmem:[%s3 + $0x20] sm:$0xff]
    %v124 = vld [vmem:[%s3 + $0x28] sm:$0xff]
    %v125 = vld [vmem:[%s3 + $0x30] sm:$0xff]
    %v126 = vld [vmem:[%s3 + $0x38] sm:$0xff]
    %v127 = vld [vmem:[%s3 + $0x40] sm:$0xff]
    %v128 = vld [vmem:[%s3 + $0x48] sm:$0xff]
    %v129 = vld [vmem:[%s3 + $0x50] sm:$0xff]
    %v130 = vld [vmem:[%s3 + $0x58] sm:$0xff]
    %v131 = vld [vmem:[%s3 + $0x60] sm:$0xff]
    %v132 = vld [vmem:[%s3 + $0x68] sm:$0xff]
    %v133 = vld [vmem:[%s3 + $0x70] sm:$0xff]
    %v134 = vld [vmem:[%s3 + $0x78] sm:$0xff]
    %v135 = vld [vmem:[%s4] sm:$0x1]
    %v137 = vlaneseq
    %v138 = vshrl.u32 %v137, 7
    %v139 = vsub.s32 0, %v138
    %v140 = vrot.slane %v135, %v139
    %142 = vmatprep.subr.mxu0 0.0
    %143 = vmatpush1.msra.mxu0 %v119
    %144 = vmatprep.subr.mxu0 0.0
    %145 = vmatpush1.msra.mxu0 %v120
    %146 = vmatprep.subr.mxu0 0.0
    %147 = vmatpush1.msra.mxu0 %v121
    %148 = vmatprep.subr.mxu0 0.0
    %149 = vmatpush1.msra.mxu0 %v122
    %150 = vmatprep.subr.mxu0 0.0
    %151 = vmatpush1.msra.mxu0 %v123
    %152 = vmatprep.subr.mxu0 0.0
    %153 = vmatpush1.msra.mxu0 %v124
    %154 = vmatprep.subr.mxu0 0.0
    %155 = vmatpush1.msra.mxu0 %v125
    %156 = vmatprep.subr.mxu0 0.0
    %157 = vmatpush1.msra.mxu0 %v126
    %158 = vmatprep.subr.mxu0 0.0
    %159 = vmatpush1.msra.mxu0 %v127
    %160 = vmatprep.subr.mxu0 0.0
    %161 = vmatpush1.msra.mxu0 %v128
    %162 = vmatprep.subr.mxu0 0.0
    %163 = vmatpush1.msra.mxu0 %v129
    %164 = vmatprep.subr.mxu0 0.0
    %165 = vmatpush1.msra.mxu0 %v130
    %166 = vmatprep.subr.mxu0 0.0
    %167 = vmatpush1.msra.mxu0 %v131
    %168 = vmatprep.subr.mxu0 0.0
    %169 = vmatpush1.msra.mxu0 %v132
    %170 = vmatprep.subr.mxu0 0.0
    %171 = vmatpush1.msra.mxu0 %v133
    %172 = vmatprep.subr.mxu0 0.0
    %173 = vmatpush1.msra.mxu0 %v134
    %174 = vmatprep.subr.mxu0 0.0
    %175 = vmatpush1.msra.mxu0 0.0
    %176 = vmatprep.subr.mxu0 0.0
    %177 = vmatpush1.msra.mxu0 0.0
    %178 = vmatprep.subr.mxu0 0.0
    %179 = vmatpush1.msra.mxu0 0.0
    %180 = vmatprep.subr.mxu0 0.0
    %181 = vmatpush1.msra.mxu0 0.0
    %182 = vmatprep.subr.mxu0 0.0
    %183 = vmatpush1.msra.mxu0 0.0
    %184 = vmatprep.subr.mxu0 0.0
    %185 = vmatpush1.msra.mxu0 0.0
    %186 = vmatprep.subr.mxu0 0.0
    %187 = vmatpush1.msra.mxu0 0.0
    %188 = vmatprep.subr.mxu0 0.0
    %189 = vmatpush1.msra.mxu0 0.0
    %190 = vmatprep.subr.mxu0 0.0
    %191 = vmatpush1.msra.mxu0 0.0
    %192 = vmatprep.subr.mxu0 0.0
    %193 = vmatpush1.msra.mxu0 0.0
    %194 = vmatprep.subr.mxu0 0.0
    %195 = vmatpush1.msra.mxu0 0.0
    %196 = vmatprep.subr.mxu0 0.0
    %197 = vmatpush1.msra.mxu0 0.0
    %198 = vmatprep.subr.mxu0 0.0
    %199 = vmatpush1.msra.mxu0 0.0
    %200 = vmatprep.subr.mxu0 0.0
    %201 = vmatpush1.msra.mxu0 0.0
    %202 = vmatprep.subr.mxu0 0.0
    %203 = vmatpush1.msra.mxu0 0.0
    %204 = vmatprep.subr.mxu0 0.0
    %205 = vmatpush1.msra.mxu0 0.0
    %206 = vmatprep.mubr.f32.mxu0 0.0
    %207 = vmatmul.mubr.f32.gmra.mrb[0].mxu0 %v117
    %v208 = vpop.f32.mrb[0].mxu0
    %v209 = vadd.f32 %v140, %v208
    %v210 = vpop.f32.mrb[0].mxu0
    %211 = vmatprep.mubr.f32.mxu0 0.0
    %212 = vmatmul.mubr.f32.gmra.mrb[0].mxu0 %v118
    %v213 = vpop.f32.mrb[0].mxu0
    %v214 = vadd.f32 %v140, %v213
    %v215 = vpop.f32.mrb[0].mxu0
    %216 = vdwg.mxu0
    %v217 = vtanh.pop %v209
    %v218 = vtanh.pop %v214
    %vm219 = vcmask 261120
    %220 = vst.msk [vmem:[#allocation2] sm:$0xff] %vm219, %v217
    %221 = vst.msk [vmem:[#allocation2 + $0x8] sm:$0xff] %vm219, %v218
    // Predicated region
    $region22: #{tpu_custom_call.1} parent=1 // pred_check
      _
    $region23: #{tpu_custom_call.1} parent=1 // pred_check_branch
      %223 = sbr.rel (0) target = $region25
    $region24: #{tpu_custom_call.1} parent=1 // pred_region
      %s225 = ssub.s32 256, 256
      %226 = vsyncadd [#allocation3], %s225
      %s227 = sshll.u32 [#allocation2], 4
      %s228 = int_to_ptr.vmem [resolvable:$true] %s227
      %233 = dma.vmem_to_hbm [thread:$0]  %s228, 256, %s5, [#allocation3], 128, 128, 8
    $region25: #{tpu_custom_call.1} parent=1 // pred_fallthru
      _
    // Predicated region
    $region26: #{tpu_custom_call.1} parent=1 // pred_check
      _
    $region27: #{tpu_custom_call.1} parent=1 // pred_check_branch
      %235 = sbr.rel (0) target = $region29
    $region28: #{tpu_custom_call.1} parent=1 // pred_region
      %236 = dma.done [#allocation3], 256
    $region29: #{tpu_custom_call.1} parent=1 // pred_fallthru
      _
    %237 = vsyncpa [#allocation3], 1

</llo_original>
